<compile_context>
chip_gen: v7x
topology: tpu7x:2x2x1
jax: 0.10.0
libtpu: 0.0.40
codegen_flags: <defaults>
</compile_context>

<pallas_src>
import jax
import jax.numpy as jnp
from jax.experimental import pallas as pl
from jax.experimental.pallas import tpu as pltpu


def _make_mono_network_kernel(num_mono_layers: int):
    """Fused kernel. Ref order:
      x (in_dim, TB),
      scale0_eff (in_dim, 1), bias0 (in_dim, 1),
      (W_sq_i (out,in), b_i (out,1)) * num_mono_layers,
      scaleF_sq (last, 1), biasF (last, 1),
      out (out_dim, TB)
    """

    def kernel(*refs):
        x_ref = refs[0]
        s0_ref, b0_ref = refs[1], refs[2]
        o_ref = refs[-1]

        # Fused monotonicity flip + first norm layer (scale0_eff = mono * scale0^2,
        # pre-folded in the wrapper).  (in_dim, 1) broadcasts over lanes (batch).
        h = s0_ref[...] * x_ref[...].astype(jnp.float32) - b0_ref[...]

        # Monotone layers: tanh( W_sq @ h + b ).  Batch sits on the MXU N axis.
        for li in range(num_mono_layers):
            w_ref = refs[3 + 2 * li]   # pre-squared (out, in)
            b_ref = refs[4 + 2 * li]   # (out, 1)
            w = w_ref[...]
            z = jnp.dot(w, h.astype(w.dtype),
                        preferred_element_type=jnp.float32)   # (out, TB), f32 acc
            h = jnp.tanh(z + b_ref[...])                       # EUP tanh, f32

        # Final norm layer (scaleF already squared in the wrapper).
        sf_ref = refs[3 + 2 * num_mono_layers]
        bf_ref = refs[4 + 2 * num_mono_layers]
        o_ref[...] = (sf_ref[...] * h - bf_ref[...]).astype(o_ref.dtype)

    return kernel


def mono_network_forward(x, params, *, batch_tile=1024,
                         matmul_dtype=jnp.float32):
    """Run the fused MonoNetwork forward pass.

    x: (B, in_dim) f32
    params: dict with
      'mono'   : (1, in_dim)  f32, entries in {-1., +1.}
      'norm0'  : (scale (1,in_dim), bias (1,in_dim))
      'layers' : list of (W (out,in), b (1,out))
      'normf'  : (scale (1,last), bias (1,last))

    batch_tile: batch rows per grid step (lane dimension of each block).
                With hidden dims this small even 1024 uses < 1 MiB of VMEM
                per double-buffered tile, safely inside v7x's 64 MiB.
    matmul_dtype: jnp.float32 (exact) or jnp.bfloat16 (v6e/v7x MXU fast path;
                  relax the numerical tolerance if you enable it).
    """
    layers = params["layers"]
    n_layers = len(layers)
    B, in_dim = x.shape
    out_dim = layers[-1][0].shape[0]

    # ---- one-time parameter preprocessing (constants; outside the grid loop) ----
    mono = params["mono"].astype(jnp.float32)                       # (1, in_dim)
    s0, b0 = params["norm0"]
    c0_scale = (mono * jnp.square(s0.astype(jnp.float32))).reshape(in_dim, 1)
    c0_bias = b0.astype(jnp.float32).reshape(in_dim, 1)

    layer_inputs = []
    layer_dims = []
    for W, b in layers:
        d_out, d_in = W.shape
        layer_dims.append((d_in, d_out))
        w_sq = jnp.square(W.astype(jnp.float32)).astype(matmul_dtype)  # (out, in)
        layer_inputs.append(w_sq)
        layer_inputs.append(b.astype(jnp.float32).reshape(d_out, 1))

    sf, bf = params["normf"]
    cf_scale = jnp.square(sf.astype(jnp.float32)).reshape(out_dim, 1)
    cf_bias = bf.astype(jnp.float32).reshape(out_dim, 1)

    # ---- lane-dense (D, B) activation layout + batch tiling over lanes ----
    x_t = x.astype(jnp.float32).T                                   # (in_dim, B)
    if B <= batch_tile:
        tb, b_pad = B, B          # single block == full extent (always legal)
    else:
        tb = batch_tile           # multiple of 128 -> lane-aligned blocks
        b_pad = pl.cdiv(B, tb) * tb
        if b_pad != B:
            x_t = jnp.pad(x_t, ((0, 0), (0, b_pad - B)))
    grid = (b_pad // tb,)

    in_arrays = [x_t, c0_scale, c0_bias] + layer_inputs + [cf_scale, cf_bias]

    def _const_spec(a):
        return pl.BlockSpec(a.shape, lambda i: (0, 0))

    in_specs = [pl.BlockSpec((in_dim, tb), lambda i: (0, i))]
    in_specs += [_const_spec(a) for a in in_arrays[1:]]
    out_specs = pl.BlockSpec((out_dim, tb), lambda i: (0, i))

    # Advisory scheduler hint.
    flops = 2 * b_pad * sum(di * do for di, do in layer_dims)
    transcendentals = b_pad * sum(do for _, do in layer_dims)
    bytes_accessed = 4 * (b_pad * (in_dim + out_dim)) + sum(
        a.size * a.dtype.itemsize for a in in_arrays[1:])

    out_t = pl.pallas_call(
        _make_mono_network_kernel(n_layers),
        out_shape=jax.ShapeDtypeStruct((out_dim, b_pad), jnp.float32),
        grid=grid,
        in_specs=in_specs,
        out_specs=out_specs,
        compiler_params=pltpu.CompilerParams(
            dimension_semantics=("parallel",),        # 2-TC sharding on v7x
            vmem_limit_bytes=32 * 1024 * 1024,        # explicit; > v5e 16 MiB default
        ),
        cost_estimate=pl.CostEstimate(
            flops=flops,
            transcendentals=transcendentals,
            bytes_accessed=bytes_accessed,
        ),
    )(*in_arrays)

    # back to the module's (B, out_dim) convention (drop batch padding).
    return out_t[:, :B].T


def init_params(key, input_monotonicity, hidden_layers):
    """Deterministic init mirroring the torch module (torch.rand -> U[0,1))."""
    in_dim = len(input_monotonicity)
    dims = [in_dim] + list(hidden_layers)

    keys = jax.random.split(key, 2 + 2 * (len(dims) - 1) + 2)
    ki = iter(range(len(keys)))

    mono = jnp.asarray([input_monotonicity], dtype=jnp.float32)  # (1, in_dim)

    norm0_scale = jax.random.uniform(keys[next(ki)], (1, in_dim), jnp.float32)
    norm0_bias = jax.random.uniform(keys[next(ki)], (1, in_dim), jnp.float32)

    layer_params = []
    for d_in, d_out in zip(dims, dims[1:]):
        W = jax.random.uniform(keys[next(ki)], (d_out, d_in), jnp.float32)
        b = jax.random.uniform(keys[next(ki)], (1, d_out), jnp.float32)
        layer_params.append((W, b))

    last = hidden_layers[-1]
    normf_scale = jax.random.uniform(keys[next(ki)], (1, last), jnp.float32)
    normf_bias = jax.random.uniform(keys[next(ki)], (1, last), jnp.float32)

    return {
        "mono": mono,
        "norm0": (norm0_scale, norm0_bias),
        "layers": layer_params,
        "normf": (normf_scale, normf_bias),
    }


def mono_network_reference(x, params):
    """Pure-JAX reference (mirrors the PyTorch forward exactly)."""
    h = params["mono"] * x
    s0, b0 = params["norm0"]
    h = jnp.square(s0) * h - b0
    for W, b in params["layers"]:
        h = jnp.tanh(h @ jnp.square(W).T + b)
    sf, bf = params["normf"]
    return jnp.square(sf) * h - bf


if __name__ == "__main__":
    # small shapes consistent with the module
    input_monotonicity = [1, -1, 1, -1, 1, 1, -1, 1]  # in_dim = 8
    hidden_layers = [32, 16]
    batch = 8

    key = jax.random.PRNGKey(0)
    k_params, k_x = jax.random.split(key)

    params = init_params(k_params, input_monotonicity, hidden_layers)
    x = jax.random.normal(k_x, (batch, len(input_monotonicity)), jnp.float32)

    # f32 matmul path keeps the 1e-5 check tight; pass matmul_dtype=jnp.bfloat16
    # for the v6e/v7x MXU fast path (relax tolerance accordingly).
    out = mono_network_forward(x, params)
    out = jax.block_until_ready(out)

    ref = mono_network_reference(x, params)
    assert out.shape == (batch, hidden_layers[-1])
    assert jnp.allclose(out, ref, atol=1e-5, rtol=1e-5), "mismatch vs reference"

    # also exercise the multi-tile (padded) batch path
    big_b = 300
    xb = jax.random.normal(jax.random.PRNGKey(1), (big_b, len(input_monotonicity)),
                           jnp.float32)
    out_b = jax.block_until_ready(
        mono_network_forward(xb, params, batch_tile=128))
    assert jnp.allclose(out_b, mono_network_reference(xb, params),
                        atol=1e-5, rtol=1e-5), "mismatch vs reference (tiled)"

    print("KERNEL_OK")
</pallas_src>

<mosaic_0001>
module attributes {stable_mosaic.version = 11 : i64} {
  func.func @kernel(%arg0: i32, %arg1: memref<8x8xf32, #tpu.memory_space<vmem>>, %arg2: memref<8x1xf32, #tpu.memory_space<vmem>>, %arg3: memref<8x1xf32, #tpu.memory_space<vmem>>, %arg4: memref<32x8xf32, #tpu.memory_space<vmem>>, %arg5: memref<32x1xf32, #tpu.memory_space<vmem>>, %arg6: memref<16x32xf32, #tpu.memory_space<vmem>>, %arg7: memref<16x1xf32, #tpu.memory_space<vmem>>, %arg8: memref<16x1xf32, #tpu.memory_space<vmem>>, %arg9: memref<16x1xf32, #tpu.memory_space<vmem>>, %arg10: memref<16x8xf32, #tpu.memory_space<vmem>>) attributes {dimension_semantics = [#tpu.dimension_semantics<parallel>], iteration_bounds = array<i64: 1>, scalar_prefetch = 0 : i64, scratch_operands = 0 : i64, tpu.core_type = #tpu.core_type<tc>, window_params = [{transform_indices = @transform_0, window_bounds = array<i64: 8, 8>}, {pipeline_mode = #tpu.pipeline_mode<synchronous>, transform_indices = @transform_1, window_bounds = array<i64: 8, 1>}, {pipeline_mode = #tpu.pipeline_mode<synchronous>, transform_indices = @transform_2, window_bounds = array<i64: 8, 1>}, {pipeline_mode = #tpu.pipeline_mode<synchronous>, transform_indices = @transform_3, window_bounds = array<i64: 32, 8>}, {pipeline_mode = #tpu.pipeline_mode<synchronous>, transform_indices = @transform_4, window_bounds = array<i64: 32, 1>}, {pipeline_mode = #tpu.pipeline_mode<synchronous>, transform_indices = @transform_5, window_bounds = array<i64: 16, 32>}, {pipeline_mode = #tpu.pipeline_mode<synchronous>, transform_indices = @transform_6, window_bounds = array<i64: 16, 1>}, {pipeline_mode = #tpu.pipeline_mode<synchronous>, transform_indices = @transform_7, window_bounds = array<i64: 16, 1>}, {pipeline_mode = #tpu.pipeline_mode<synchronous>, transform_indices = @transform_8, window_bounds = array<i64: 16, 1>}, {transform_indices = @transform_9, window_bounds = array<i64: 16, 8>}]} {
    %c0 = arith.constant 0 : index
    %c0_0 = arith.constant 0 : index
    %0 = vector.load %arg2[%c0, %c0_0] : memref<8x1xf32, #tpu.memory_space<vmem>>, vector<8x1xf32>
    %c0_1 = arith.constant 0 : index
    %c0_2 = arith.constant 0 : index
    %1 = vector.load %arg1[%c0_1, %c0_2] : memref<8x8xf32, #tpu.memory_space<vmem>>, vector<8x8xf32>
    %2 = vector.broadcast %0 : vector<8x1xf32> to vector<8x8xf32>
    %3 = arith.mulf %2, %1 : vector<8x8xf32>
    %c0_3 = arith.constant 0 : index
    %c0_4 = arith.constant 0 : index
    %4 = vector.load %arg3[%c0_3, %c0_4] : memref<8x1xf32, #tpu.memory_space<vmem>>, vector<8x1xf32>
    %5 = vector.broadcast %4 : vector<8x1xf32> to vector<8x8xf32>
    %6 = arith.subf %3, %5 : vector<8x8xf32>
    %c0_5 = arith.constant 0 : index
    %c0_6 = arith.constant 0 : index
    %7 = vector.load %arg4[%c0_5, %c0_6] : memref<32x8xf32, #tpu.memory_space<vmem>>, vector<32x8xf32>
    %cst = arith.constant dense<0.000000e+00> : vector<32x8xf32>
    %8 = tpu.matmul %7, %6, %cst {dimension_numbers = #tpu.dot_dimension_numbers<[1], [0], [0], [1], [0, 0, 1, 1], [], []>} : vector<32x8xf32>, vector<8x8xf32>, vector<32x8xf32> -> vector<32x8xf32>
    %c0_7 = arith.constant 0 : index
    %c0_8 = arith.constant 0 : index
    %9 = vector.load %arg5[%c0_7, %c0_8] : memref<32x1xf32, #tpu.memory_space<vmem>>, vector<32x1xf32>
    %10 = vector.broadcast %9 : vector<32x1xf32> to vector<32x8xf32>
    %11 = arith.addf %8, %10 : vector<32x8xf32>
    %12 = math.tanh %11 : vector<32x8xf32>
    %c0_9 = arith.constant 0 : index
    %c0_10 = arith.constant 0 : index
    %13 = vector.load %arg6[%c0_9, %c0_10] : memref<16x32xf32, #tpu.memory_space<vmem>>, vector<16x32xf32>
    %cst_11 = arith.constant dense<0.000000e+00> : vector<16x8xf32>
    %14 = tpu.matmul %13, %12, %cst_11 {dimension_numbers = #tpu.dot_dimension_numbers<[1], [0], [0], [1], [0, 0, 1, 1], [], []>} : vector<16x32xf32>, vector<32x8xf32>, vector<16x8xf32> -> vector<16x8xf32>
    %c0_12 = arith.constant 0 : index
    %c0_13 = arith.constant 0 : index
    %15 = vector.load %arg7[%c0_12, %c0_13] : memref<16x1xf32, #tpu.memory_space<vmem>>, vector<16x1xf32>
    %16 = vector.broadcast %15 : vector<16x1xf32> to vector<16x8xf32>
    %17 = arith.addf %14, %16 : vector<16x8xf32>
    %18 = math.tanh %17 : vector<16x8xf32>
    %c0_14 = arith.constant 0 : index
    %c0_15 = arith.constant 0 : index
    %19 = vector.load %arg8[%c0_14, %c0_15] : memref<16x1xf32, #tpu.memory_space<vmem>>, vector<16x1xf32>
    %20 = vector.broadcast %19 : vector<16x1xf32> to vector<16x8xf32>
    %21 = arith.mulf %20, %18 : vector<16x8xf32>
    %c0_16 = arith.constant 0 : index
    %c0_17 = arith.constant 0 : index
    %22 = vector.load %arg9[%c0_16, %c0_17] : memref<16x1xf32, #tpu.memory_space<vmem>>, vector<16x1xf32>
    %23 = vector.broadcast %22 : vector<16x1xf32> to vector<16x8xf32>
    %24 = arith.subf %21, %23 : vector<16x8xf32>
    %c0_18 = arith.constant 0 : index
    %c0_19 = arith.constant 0 : index
    %25 = vector.load %arg10[%c0_18, %c0_19] : memref<16x8xf32, #tpu.memory_space<vmem>>, vector<16x8xf32>
    tpu.vector_store %arg10[%c0_18, %c0_19], %24 {strides = array<i32>} : memref<16x8xf32, #tpu.memory_space<vmem>>, vector<16x8xf32>,
    return
  }
  func.func @transform_0(%arg0: i32) -> (i32, i32) {
    %c0_i32 = arith.constant 0 : i32
    %c0_i32_0 = arith.constant 0 : i32
    return %c0_i32, %arg0 : i32, i32
  }
  func.func @transform_1(%arg0: i32) -> (i32, i32) {
    %c0_i32 = arith.constant 0 : i32
    %c0_i32_0 = arith.constant 0 : i32
    %c0_i32_1 = arith.constant 0 : i32
    return %c0_i32, %c0_i32_0 : i32, i32
  }
  func.func @transform_2(%arg0: i32) -> (i32, i32) {
    %c0_i32 = arith.constant 0 : i32
    %c0_i32_0 = arith.constant 0 : i32
    %c0_i32_1 = arith.constant 0 : i32
    return %c0_i32, %c0_i32_0 : i32, i32
  }
  func.func @transform_3(%arg0: i32) -> (i32, i32) {
    %c0_i32 = arith.constant 0 : i32
    %c0_i32_0 = arith.constant 0 : i32
    %c0_i32_1 = arith.constant 0 : i32
    return %c0_i32, %c0_i32_0 : i32, i32
  }
  func.func @transform_4(%arg0: i32) -> (i32, i32) {
    %c0_i32 = arith.constant 0 : i32
    %c0_i32_0 = arith.constant 0 : i32
    %c0_i32_1 = arith.constant 0 : i32
    return %c0_i32, %c0_i32_0 : i32, i32
  }
  func.func @transform_5(%arg0: i32) -> (i32, i32) {
    %c0_i32 = arith.constant 0 : i32
    %c0_i32_0 = arith.constant 0 : i32
    %c0_i32_1 = arith.constant 0 : i32
    return %c0_i32, %c0_i32_0 : i32, i32
  }
  func.func @transform_6(%arg0: i32) -> (i32, i32) {
    %c0_i32 = arith.constant 0 : i32
    %c0_i32_0 = arith.constant 0 : i32
    %c0_i32_1 = arith.constant 0 : i32
    return %c0_i32, %c0_i32_0 : i32, i32
  }
  func.func @transform_7(%arg0: i32) -> (i32, i32) {
    %c0_i32 = arith.constant 0 : i32
    %c0_i32_0 = arith.constant 0 : i32
    %c0_i32_1 = arith.constant 0 : i32
    return %c0_i32, %c0_i32_0 : i32, i32
  }
  func.func @transform_8(%arg0: i32) -> (i32, i32) {
    %c0_i32 = arith.constant 0 : i32
    %c0_i32_0 = arith.constant 0 : i32
    %c0_i32_1 = arith.constant 0 : i32
    return %c0_i32, %c0_i32_0 : i32, i32
  }
  func.func @transform_9(%arg0: i32) -> (i32, i32) {
    %c0_i32 = arith.constant 0 : i32
    %c0_i32_0 = arith.constant 0 : i32
    return %c0_i32, %arg0 : i32, i32
  }
}

</mosaic_0001>

<llo_original>
// kernel: tpu_custom_call.1
$region0: #{tpu_custom_call.1}
  #allocation0 [shape = 'u32[]', space=smem, size = 0x4, offset = 0x4, fixed_abs, tag = 'smem constant byte address 0x4 - core index']
  #allocation1 [shape = 'u32[144,128]{1,0:T(1,128)}', space=vmem, size = 0x12000, scoped, tag = 'internal scratch']
  %s0 = inlined_call_operand.vmem [shape: f32[8,8], index: 0, kind: input, shape index: {}]
  %s1 = inlined_call_operand.vmem [shape: f32[8,1], index: 1, kind: input, shape index: {}]
  %s2 = inlined_call_operand.vmem [shape: f32[8,1], index: 2, kind: input, shape index: {}]
  %s3 = inlined_call_operand.vmem [shape: f32[32,8], index: 3, kind: input, shape index: {}]
  %s4 = inlined_call_operand.vmem [shape: f32[32,1], index: 4, kind: input, shape index: {}]
  %s5 = inlined_call_operand.vmem [shape: f32[16,32], index: 5, kind: input, shape index: {}]
  %s6 = inlined_call_operand.vmem [shape: f32[16,1], index: 6, kind: input, shape index: {}]
  %s7 = inlined_call_operand.vmem [shape: f32[16,1], index: 7, kind: input, shape index: {}]
  %s8 = inlined_call_operand.vmem [shape: f32[16,1], index: 8, kind: input, shape index: {}]
  %s9 = inlined_call_operand.vmem [shape: f32[16,8], index: 9, kind: output, shape index: {}]
  %s10 = sld [smem:[#allocation0]]
  $region46: #{tpu_custom_call.1} parent=0
    _
  %s12 = ssub.s32 1, %s10
  %s13 = scalar_select 0, %s12, %s10
  // Predicated region
  $region2: #{tpu_custom_call.1} parent=0 // pred_check
    _
  $region3: #{tpu_custom_call.1} parent=0 // pred_check_branch
    %15 = sbr.rel (0) target = $region5
  $region4: #{tpu_custom_call.1} parent=0 // pred_region
    _
  $region5: #{tpu_custom_call.1} parent=0 // pred_fallthru
    _
  // Predicated region
  $region6: #{tpu_custom_call.1} parent=0 // pred_check
    _
  $region7: #{tpu_custom_call.1} parent=0 // pred_check_branch
    %17 = sbr.rel (0) target = $region9
  $region8: #{tpu_custom_call.1} parent=0 // pred_region
    _
  $region9: #{tpu_custom_call.1} parent=0 // pred_fallthru
    _
  // Predicated region
  $region10: #{tpu_custom_call.1} parent=0 // pred_check
    _
  $region11: #{tpu_custom_call.1} parent=0 // pred_check_branch
    %19 = sbr.rel (0) target = $region13
  $region12: #{tpu_custom_call.1} parent=0 // pred_region
    _
  $region13: #{tpu_custom_call.1} parent=0 // pred_fallthru
    _
  // Predicated region
  $region14: #{tpu_custom_call.1} parent=0 // pred_check
    _
  $region15: #{tpu_custom_call.1} parent=0 // pred_check_branch
    %21 = sbr.rel (0) target = $region17
  $region16: #{tpu_custom_call.1} parent=0 // pred_region
    _
  $region17: #{tpu_custom_call.1} parent=0 // pred_fallthru
    _
  // Predicated region
  $region18: #{tpu_custom_call.1} parent=0 // pred_check
    _
  $region19: #{tpu_custom_call.1} parent=0 // pred_check_branch
    %23 = sbr.rel (0) target = $region21
  $region20: #{tpu_custom_call.1} parent=0 // pred_region
    _
  $region21: #{tpu_custom_call.1} parent=0 // pred_fallthru
    _
  // Predicated region
  $region22: #{tpu_custom_call.1} parent=0 // pred_check
    _
  $region23: #{tpu_custom_call.1} parent=0 // pred_check_branch
    %25 = sbr.rel (0) target = $region25
  $region24: #{tpu_custom_call.1} parent=0 // pred_region
    _
  $region25: #{tpu_custom_call.1} parent=0 // pred_fallthru
    _
  // Predicated region
  $region26: #{tpu_custom_call.1} parent=0 // pred_check
    _
  $region27: #{tpu_custom_call.1} parent=0 // pred_check_branch
    %27 = sbr.rel (0) target = $region29
  $region28: #{tpu_custom_call.1} parent=0 // pred_region
    _
  $region29: #{tpu_custom_call.1} parent=0 // pred_fallthru
    _
  // Predicated region
  $region30: #{tpu_custom_call.1} parent=0 // pred_check
    _
  $region31: #{tpu_custom_call.1} parent=0 // pred_check_branch
    %29 = sbr.rel (0) target = $region33
  $region32: #{tpu_custom_call.1} parent=0 // pred_region
    _
  $region33: #{tpu_custom_call.1} parent=0 // pred_fallthru
    _
  // Predicated region
  $region34: #{tpu_custom_call.1} parent=0 // pred_check
    _
  $region35: #{tpu_custom_call.1} parent=0 // pred_check_branch
    %31 = sbr.rel (0) target = $region37
  $region36: #{tpu_custom_call.1} parent=0 // pred_region
    _
  $region37: #{tpu_custom_call.1} parent=0 // pred_fallthru
    _
  %v32 = vld [vmem:[%s1] sm:$0xff]
  %v33 = vld [vmem:[%s0] sm:$0xff]
  %35 = vset.pattern.permute.xlu0 0
  %36 = vperm.xlu0 %35, %v32
  %v37 = vpop.permute.xlu0 %36
  %v39 = vmul.f32 %v37, %v33
  %v40 = vld [vmem:[%s2] sm:$0xff]
  %42 = vset.pattern.permute.xlu0 0
  %43 = vperm.xlu0 %42, %v40
  %v44 = vpop.permute.xlu0 %43
  %v46 = vsub.f32 %v39, %v44
  %v47 = vld [vmem:[%s3] sm:$0xff]
  %v48 = vld [vmem:[%s3 + $0x8] sm:$0xff]
  %v49 = vld [vmem:[%s3 + $0x10] sm:$0xff]
  %v50 = vld [vmem:[%s3 + $0x18] sm:$0xff]
  %v51 = vld [vmem:[%s4] sm:$0xff]
  %v52 = vld [vmem:[%s4 + $0x8] sm:$0xff]
  %v53 = vld [vmem:[%s4 + $0x10] sm:$0xff]
  %v54 = vld [vmem:[%s4 + $0x18] sm:$0xff]
  %56 = vset.pattern.permute.xlu0 0
  %57 = vperm.xlu0 %56, %v51
  %v58 = vpop.permute.xlu0 %57
  %61 = vset.pattern.permute.xlu0 0
  %62 = vperm.xlu0 %61, %v52
  %v63 = vpop.permute.xlu0 %62
  %66 = vset.pattern.permute.xlu0 0
  %67 = vperm.xlu0 %66, %v53
  %v68 = vpop.permute.xlu0 %67
  %71 = vset.pattern.permute.xlu0 0
  %72 = vperm.xlu0 %71, %v54
  %v73 = vpop.permute.xlu0 %72
  %vm75 = vcmask 64512
  %v77 = vsel %vm75, %v47, 0
  %v80 = vsel %vm75, %v48, 0
  %v83 = vsel %vm75, %v49, 0
  %v86 = vsel %vm75, %v50, 0
  %88 = vmatprep.subr.mxu0 0.0
  %89 = vmatpush1.msra.mxu0 %v46
  %90 = vmatprep.subr.mxu0 0.0
  %91 = vmatpush1.msra.mxu0 0.0
  %92 = vmatprep.subr.mxu0 0.0
  %93 = vmatpush1.msra.mxu0 0.0
  %94 = vmatprep.subr.mxu0 0.0
  %95 = vmatpush1.msra.mxu0 0.0
  %96 = vmatprep.subr.mxu0 0.0
  %97 = vmatpush1.msra.mxu0 0.0
  %98 = vmatprep.subr.mxu0 0.0
  %99 = vmatpush1.msra.mxu0 0.0
  %100 = vmatprep.subr.mxu0 0.0
  %101 = vmatpush1.msra.mxu0 0.0
  %102 = vmatprep.subr.mxu0 0.0
  %103 = vmatpush1.msra.mxu0 0.0
  %104 = vmatprep.subr.mxu0 0.0
  %105 = vmatpush1.msra.mxu0 0.0
  %106 = vmatprep.subr.mxu0 0.0
  %107 = vmatpush1.msra.mxu0 0.0
  %108 = vmatprep.subr.mxu0 0.0
  %109 = vmatpush1.msra.mxu0 0.0
  %110 = vmatprep.subr.mxu0 0.0
  %111 = vmatpush1.msra.mxu0 0.0
  %112 = vmatprep.subr.mxu0 0.0
  %113 = vmatpush1.msra.mxu0 0.0
  %114 = vmatprep.subr.mxu0 0.0
  %115 = vmatpush1.msra.mxu0 0.0
  %116 = vmatprep.subr.mxu0 0.0
  %117 = vmatpush1.msra.mxu0 0.0
  %118 = vmatprep.subr.mxu0 0.0
  %119 = vmatpush1.msra.mxu0 0.0
  %120 = vmatprep.subr.mxu0 0.0
  %121 = vmatpush1.msra.mxu0 0.0
  %122 = vmatprep.subr.mxu0 0.0
  %123 = vmatpush1.msra.mxu0 0.0
  %124 = vmatprep.subr.mxu0 0.0
  %125 = vmatpush1.msra.mxu0 0.0
  %126 = vmatprep.subr.mxu0 0.0
  %127 = vmatpush1.msra.mxu0 0.0
  %128 = vmatprep.subr.mxu0 0.0
  %129 = vmatpush1.msra.mxu0 0.0
  %130 = vmatprep.subr.mxu0 0.0
  %131 = vmatpush1.msra.mxu0 0.0
  %132 = vmatprep.subr.mxu0 0.0
  %133 = vmatpush1.msra.mxu0 0.0
  %134 = vmatprep.subr.mxu0 0.0
  %135 = vmatpush1.msra.mxu0 0.0
  %136 = vmatprep.subr.mxu0 0.0
  %137 = vmatpush1.msra.mxu0 0.0
  %138 = vmatprep.subr.mxu0 0.0
  %139 = vmatpush1.msra.mxu0 0.0
  %140 = vmatprep.subr.mxu0 0.0
  %141 = vmatpush1.msra.mxu0 0.0
  %142 = vmatprep.subr.mxu0 0.0
  %143 = vmatpush1.msra.mxu0 0.0
  %144 = vmatprep.subr.mxu0 0.0
  %145 = vmatpush1.msra.mxu0 0.0
  %146 = vmatprep.subr.mxu0 0.0
  %147 = vmatpush1.msra.mxu0 0.0
  %148 = vmatprep.subr.mxu0 0.0
  %149 = vmatpush1.msra.mxu0 0.0
  %150 = vmatprep.subr.mxu0 0.0
  %151 = vmatpush1.msra.mxu0 0.0
  %152 = vmatprep.mubr.f32.mxu0 0.0
  %153 = vmatmul.mubr.f32.gmra.mrb[0].mxu0 %v77
  %v154 = vpop.f32.mrb[0].mxu0
  %v155 = vadd.f32 %v58, %v154
  %v156 = vpop.f32.mrb[0].mxu0
  %157 = vmatprep.mubr.f32.mxu0 0.0
  %158 = vmatmul.mubr.f32.gmra.mrb[0].mxu0 %v80
  %v159 = vpop.f32.mrb[0].mxu0
  %v160 = vadd.f32 %v63, %v159
  %v161 = vpop.f32.mrb[0].mxu0
  %162 = vmatprep.mubr.f32.mxu0 0.0
  %163 = vmatmul.mubr.f32.gmra.mrb[0].mxu0 %v83
  %v164 = vpop.f32.mrb[0].mxu0
  %v165 = vadd.f32 %v68, %v164
  %v166 = vpop.f32.mrb[0].mxu0
  %167 = vmatprep.mubr.f32.mxu0 0.0
  %168 = vmatmul.mubr.f32.gmra.mrb[0].mxu0 %v86
  %v169 = vpop.f32.mrb[0].mxu0
  %v170 = vadd.f32 %v73, %v169
  %v171 = vpop.f32.mrb[0].mxu0
  %172 = vdwg.mxu0
  %v173 = vtanh.pop %v155
  %v174 = vtanh.pop %v160
  %v175 = vtanh.pop %v165
  %v176 = vtanh.pop %v170
  %v177 = vld [vmem:[%s5] sm:$0xff]
  %v178 = vld [vmem:[%s5 + $0x8] sm:$0xff]
  %v179 = vld [vmem:[%s6] sm:$0xff]
  %v180 = vld [vmem:[%s6 + $0x8] sm:$0xff]
  %182 = vset.pattern.permute.xlu0 0
  %183 = vperm.xlu0 %182, %v179
  %v184 = vpop.permute.xlu0 %183
  %187 = vset.pattern.permute.xlu0 0
  %188 = vperm.xlu0 %187, %v180
  %v189 = vpop.permute.xlu0 %188
  %vm191 = vcmask 261120
  %v193 = vsel %vm191, %v177, 0
  %v196 = vsel %vm191, %v178, 0
  %198 = vmatprep.subr.mxu0 0.0
  %199 = vmatpush1.msra.mxu0 %v173
  %200 = vmatprep.subr.mxu0 0.0
  %201 = vmatpush1.msra.mxu0 %v174
  %202 = vmatprep.subr.mxu0 0.0
  %203 = vmatpush1.msra.mxu0 %v175
  %204 = vmatprep.subr.mxu0 0.0
  %205 = vmatpush1.msra.mxu0 %v176
  %206 = vmatprep.subr.mxu0 0.0
  %207 = vmatpush1.msra.mxu0 0.0
  %208 = vmatprep.subr.mxu0 0.0
  %209 = vmatpush1.msra.mxu0 0.0
  %210 = vmatprep.subr.mxu0 0.0
  %211 = vmatpush1.msra.mxu0 0.0
  %212 = vmatprep.subr.mxu0 0.0
  %213 = vmatpush1.msra.mxu0 0.0
  %214 = vmatprep.subr.mxu0 0.0
  %215 = vmatpush1.msra.mxu0 0.0
  %216 = vmatprep.subr.mxu0 0.0
  %217 = vmatpush1.msra.mxu0 0.0
  %218 = vmatprep.subr.mxu0 0.0
  %219 = vmatpush1.msra.mxu0 0.0
  %220 = vmatprep.subr.mxu0 0.0
  %221 = vmatpush1.msra.mxu0 0.0
  %222 = vmatprep.subr.mxu0 0.0
  %223 = vmatpush1.msra.mxu0 0.0
  %224 = vmatprep.subr.mxu0 0.0
  %225 = vmatpush1.msra.mxu0 0.0
  %226 = vmatprep.subr.mxu0 0.0
  %227 = vmatpush1.msra.mxu0 0.0
  %228 = vmatprep.subr.mxu0 0.0
  %229 = vmatpush1.msra.mxu0 0.0
  %230 = vmatprep.subr.mxu0 0.0
  %231 = vmatpush1.msra.mxu0 0.0
  %232 = vmatprep.subr.mxu0 0.0
  %233 = vmatpush1.msra.mxu0 0.0
  %234 = vmatprep.subr.mxu0 0.0
  %235 = vmatpush1.msra.mxu0 0.0
  %236 = vmatprep.subr.mxu0 0.0
  %237 = vmatpush1.msra.mxu0 0.0
  %238 = vmatprep.subr.mxu0 0.0
  %239 = vmatpush1.msra.mxu0 0.0
  %240 = vmatprep.subr.mxu0 0.0
  %241 = vmatpush1.msra.mxu0 0.0
  %242 = vmatprep.subr.mxu0 0.0
  %243 = vmatpush1.msra.mxu0 0.0
  %244 = vmatprep.subr.mxu0 0.0
  %245 = vmatpush1.msra.mxu0 0.0
  %246 = vmatprep.subr.mxu0 0.0
  %247 = vmatpush1.msra.mxu0 0.0
  %248 = vmatprep.subr.mxu0 0.0
  %249 = vmatpush1.msra.mxu0 0.0
  %250 = vmatprep.subr.mxu0 0.0
  %251 = vmatpush1.msra.mxu0 0.0
  %252 = vmatprep.subr.mxu0 0.0
  %253 = vmatpush1.msra.mxu0 0.0
  %254 = vmatprep.subr.mxu0 0.0
  %255 = vmatpush1.msra.mxu0 0.0
  %256 = vmatprep.subr.mxu0 0.0
  %257 = vmatpush1.msra.mxu0 0.0
  %258 = vmatprep.subr.mxu0 0.0
  %259 = vmatpush1.msra.mxu0 0.0
  %260 = vmatprep.subr.mxu0 0.0
  %261 = vmatpush1.msra.mxu0 0.0
  %262 = vmatprep.mubr.f32.mxu0 0.0
  %263 = vmatmul.mubr.f32.gmra.mrb[0].mxu0 %v193
  %v264 = vpop.f32.mrb[0].mxu0
  %v265 = vadd.f32 %v184, %v264
  %v266 = vpop.f32.mrb[0].mxu0
  %267 = vmatprep.mubr.f32.mxu0 0.0
  %268 = vmatmul.mubr.f32.gmra.mrb[0].mxu0 %v196
  %v269 = vpop.f32.mrb[0].mxu0
  %v270 = vadd.f32 %v189, %v269
  %v271 = vpop.f32.mrb[0].mxu0
  %272 = vdwg.mxu0
  %v273 = vtanh.pop %v265
  %v274 = vtanh.pop %v270
  %v275 = vld [vmem:[%s7] sm:$0xff]
  %v276 = vld [vmem:[%s7 + $0x8] sm:$0xff]
  %278 = vset.pattern.permute.xlu0 0
  %279 = vperm.xlu0 %278, %v275
  %v280 = vpop.permute.xlu0 %279
  %283 = vset.pattern.permute.xlu0 0
  %284 = vperm.xlu0 %283, %v276
  %v285 = vpop.permute.xlu0 %284
  %v287 = vmul.f32 %v280, %v273
  %v288 = vmul.f32 %v285, %v274
  %v289 = vld [vmem:[%s8] sm:$0xff]
  %v290 = vld [vmem:[%s8 + $0x8] sm:$0xff]
  %292 = vset.pattern.permute.xlu0 0
  %293 = vperm.xlu0 %292, %v289
  %v294 = vpop.permute.xlu0 %293
  %297 = vset.pattern.permute.xlu0 0
  %298 = vperm.xlu0 %297, %v290
  %v299 = vpop.permute.xlu0 %298
  %v301 = vsub.f32 %v287, %v294
  %v302 = vsub.f32 %v288, %v299
  %303 = vst.msk [vmem:[%s9] sm:$0xff] %vm75, %v301
  %304 = vst.msk [vmem:[%s9 + $0x8] sm:$0xff] %vm75, %v302
  // Predicated region
  $region38: #{tpu_custom_call.1} parent=0 // pred_check
    _
  $region39: #{tpu_custom_call.1} parent=0 // pred_check_branch
    %306 = sbr.rel (0) target = $region41
  $region40: #{tpu_custom_call.1} parent=0 // pred_region
    _
  $region41: #{tpu_custom_call.1} parent=0 // pred_fallthru
    _
  // Predicated region
  $region42: #{tpu_custom_call.1} parent=0 // pred_check
    _
  $region43: #{tpu_custom_call.1} parent=0 // pred_check_branch
    %308 = sbr.rel (0) target = $region45
  $region44: #{tpu_custom_call.1} parent=0 // pred_region
    _
  $region45: #{tpu_custom_call.1} parent=0 // pred_fallthru
    _

</llo_original>
